<compile_context>
chip_gen: v7x
topology: tpu7x:2x2x1
jax: 0.10.0
libtpu: 0.0.40
codegen_flags: <defaults>
</compile_context>

<pallas_src>
import functools

import jax
import jax.numpy as jnp
from jax.experimental import pallas as pl
from jax.experimental.pallas import tpu as pltpu


_GATE_PERM = (0, 1, 3, 2)  # PyTorch gate order [i, f, g, o] -> kernel [i, f, o, g]


# ----------------------------------------------------------------------------
# Small host-side helpers (parameter packing / padding)
# ----------------------------------------------------------------------------
def _round_up(x, m):
    return ((x + m - 1) // m) * m


def _pad2d(a, rows, cols):
    return jnp.pad(a, ((0, rows - a.shape[0]), (0, cols - a.shape[1])))


def _perm_single(w_t, H):
    """(K, 4H) columns [i|f|g|o] -> [i|f|o|g]."""
    return jnp.concatenate([w_t[:, s * H:(s + 1) * H] for s in _GATE_PERM], axis=1)


def _perm_fused_input(w_t_list, H):
    """Shared-input weights of n cells -> gate-type-major columns
    [i_0..i_{n-1} | f_* | o_* | g_*], each block H wide."""
    cols = []
    for s in _GATE_PERM:
        for w in w_t_list:
            cols.append(w[:, s * H:(s + 1) * H])
    return jnp.concatenate(cols, axis=1)


def _perm_fused_recurrent(w_hh_t_list, H):
    """Block-diagonal recurrent weight (n*H, n*4H), gate-type-major columns,
    so [h_21 | h_22] @ W does both cells' recurrent projections in one dot."""
    n = len(w_hh_t_list)
    rows = []
    for j, w in enumerate(w_hh_t_list):
        cols = []
        for s in _GATE_PERM:
            for jj in range(n):
                if jj == j:
                    cols.append(w[:, s * H:(s + 1) * H])
                else:
                    cols.append(jnp.zeros((H, H), w.dtype))
        rows.append(jnp.concatenate(cols, axis=1))
    return jnp.concatenate(rows, axis=0)


# ----------------------------------------------------------------------------
# Parameter construction (PyTorch nn.LSTMCell layout, pre-transposed weights)
# ----------------------------------------------------------------------------
def _init_lstm_params(key, ninp, nhid):
    """Deterministic init mirroring nn.LSTMCell: U(-1/sqrt(nhid), 1/sqrt(nhid))."""
    k = 1.0 / jnp.sqrt(jnp.float32(nhid))
    k1, k2, k3, k4 = jax.random.split(key, 4)
    w_ih = jax.random.uniform(k1, (4 * nhid, ninp), jnp.float32, -k, k)
    w_hh = jax.random.uniform(k2, (4 * nhid, nhid), jnp.float32, -k, k)
    b_ih = jax.random.uniform(k3, (4 * nhid,), jnp.float32, -k, k)
    b_hh = jax.random.uniform(k4, (4 * nhid,), jnp.float32, -k, k)
    return {"w_ih_t": w_ih.T,                  # (ninp, 4H)
            "w_hh_t": w_hh.T,                  # (nhid, 4H)
            "bias": (b_ih + b_hh)[None, :]}    # (1, 4H)


def _build_param_slab(p1, cells2, nhid1, nhid2, param_dtype):
    """One lane-dense parameter slab:
         section 1 rows: [W1_ih^T ; W1_hh^T ; b1]            (cols: 4*H1)
         section 2 rows: [W2_ih^T(cat) ; W2_hh^T(blockdiag) ; b2(cat)]
       Each section is row-padded to a multiple of 8 so the kernel can slice at
       8-aligned sublane offsets; columns padded to a multiple of 128."""
    n2 = len(cells2)
    width = _round_up(max(4 * nhid1, n2 * 4 * nhid2), 128)

    sec1 = jnp.concatenate(
        [_perm_single(p1["w_ih_t"], nhid1),
         _perm_single(p1["w_hh_t"], nhid1),
         _perm_single(p1["bias"], nhid1)], axis=0)
    sec1 = _pad2d(sec1, _round_up(sec1.shape[0], 8), width)

    sec2 = jnp.concatenate(
        [_perm_fused_input([c["w_ih_t"] for c in cells2], nhid2),
         _perm_fused_recurrent([c["w_hh_t"] for c in cells2], nhid2),
         _perm_fused_input([c["bias"] for c in cells2], nhid2)], axis=0)
    sec2 = _pad2d(sec2, _round_up(sec2.shape[0], 8), width)

    return {"P": jnp.concatenate([sec1, sec2], axis=0).astype(param_dtype),
            "sec2_row0": int(sec1.shape[0]),
            "n2": n2}


def make_ame_params(key, ninp1, nhid1, ninp2, nhid2, param_dtype=jnp.bfloat16):
    assert ninp2 == nhid1, "AME feeds h_01 into lstm21/lstm22, so ninp2 == nhid1"
    k1, k2, k3 = jax.random.split(key, 3)
    p1 = _init_lstm_params(k1, ninp1, nhid1)
    p21 = _init_lstm_params(k2, ninp2, nhid2)
    p22 = _init_lstm_params(k3, ninp2, nhid2)
    return {
        "lstm1": p1, "lstm21": p21, "lstm22": p22,   # raw f32, for the reference
        "noenc": _build_param_slab(p1, [p21], nhid1, nhid2, param_dtype),
        "enc": _build_param_slab(p1, [p21, p22], nhid1, nhid2, param_dtype),
        "dims": dict(ninp1=ninp1, nhid1=nhid1, ninp2=ninp2, nhid2=nhid2),
    }


# ----------------------------------------------------------------------------
# Fused, time-looped Pallas kernel
# ----------------------------------------------------------------------------
def _ame_seq_kernel(x_ref, p_ref, s0_ref, out_ref, st_ref, *,
                    In1, H1, In2, H2, n2, sec2_row0):
    """One grid step == one AME.forward. State slab layout (lane offsets):
         [ h_01 | c_01 | h_11 (| h_enc) | c_11 (| c_enc) | pad ]
       Weights (p_ref) and the initial state (s0_ref) have constant block
       indices, so they are DMA'd once and stay resident in VMEM."""
    f32 = jnp.float32
    cdt = p_ref.dtype            # dtype feeding the MXU (bf16 or f32)
    W1 = 4 * H1
    R2 = n2 * H2                 # fused hidden width of cells 2(+3)
    W2 = 4 * R2

    @pl.when(pl.program_id(0) == 0)
    def _():                     # load the initial recurrent state once
        st_ref[...] = s0_ref[...]

    # ---- cell 1: lstm1(x_t, (h_01, c_01)) --------------------------------
    h01 = st_ref[:, 0:H1]
    c01 = st_ref[:, H1:2 * H1]
    g1 = (jnp.dot(x_ref[0].astype(cdt), p_ref[0:In1, 0:W1],
                  preferred_element_type=f32)
          + jnp.dot(h01.astype(cdt), p_ref[In1:In1 + H1, 0:W1],
                    preferred_element_type=f32)
          + p_ref[In1 + H1:In1 + H1 + 1, 0:W1].astype(f32))
    sg1 = jax.nn.sigmoid(g1[:, 0:3 * H1])            # [i | f | o] only
    gg1 = jnp.tanh(g1[:, 3 * H1:4 * H1])             # g gate only
    i1, f1, o1 = sg1[:, 0:H1], sg1[:, H1:2 * H1], sg1[:, 2 * H1:3 * H1]
    c01n = f1 * c01 + i1 * gg1
    h01n = o1 * jnp.tanh(c01n)

    # ---- cells 2 (+3): lstm21 (and lstm22) as one double-width cell ------
    r0 = sec2_row0
    h2 = st_ref[:, 2 * H1:2 * H1 + R2]               # [h_11 | h_enc]
    c2 = st_ref[:, 2 * H1 + R2:2 * H1 + 2 * R2]      # [c_11 | c_enc]
    g2 = (jnp.dot(h01n.astype(cdt), p_ref[r0:r0 + In2, 0:W2],
                  preferred_element_type=f32)
          + jnp.dot(h2.astype(cdt), p_ref[r0 + In2:r0 + In2 + R2, 0:W2],
                    preferred_element_type=f32)       # block-diag recurrent dot
          + p_ref[r0 + In2 + R2:r0 + In2 + R2 + 1, 0:W2].astype(f32))
    sg2 = jax.nn.sigmoid(g2[:, 0:3 * R2])
    gg2 = jnp.tanh(g2[:, 3 * R2:4 * R2])
    i2, f2, o2 = sg2[:, 0:R2], sg2[:, R2:2 * R2], sg2[:, 2 * R2:3 * R2]
    c2n = f2 * c2 + i2 * gg2
    h2n = o2 * jnp.tanh(c2n)

    # ---- carry new state in VMEM; emit this step's lane-dense slab -------
    st_ref[:, 0:H1] = h01n
    st_ref[:, H1:2 * H1] = c01n
    st_ref[:, 2 * H1:2 * H1 + R2] = h2n
    st_ref[:, 2 * H1 + R2:2 * H1 + 2 * R2] = c2n
    out_ref[0] = st_ref[...].astype(out_ref.dtype)   # 128/256-lane unmasked store


def _run_ame(variant, dims, x_seq, state0):
    T, B, In1 = x_seq.shape
    H1, H2, In2 = dims["nhid1"], dims["nhid2"], dims["ninp2"]
    n2, P = variant["n2"], variant["P"]
    S = state0.shape[1]

    kernel = functools.partial(
        _ame_seq_kernel, In1=In1, H1=H1, In2=In2, H2=H2, n2=n2,
        sec2_row0=variant["sec2_row0"])

    flops = 2 * T * B * (In1 * 4 * H1 + H1 * 4 * H1
                         + In2 * n2 * 4 * H2 + (n2 * H2) * (n2 * 4 * H2))
    transc = T * B * (5 * H1 + 5 * n2 * H2)
    bytes_accessed = (int(x_seq.size) * x_seq.dtype.itemsize
                      + int(P.size) * P.dtype.itemsize
                      + int(state0.size) * state0.dtype.itemsize
                      + T * B * S * 4)

    return pl.pallas_call(
        kernel,
        out_shape=jax.ShapeDtypeStruct((T, B, S), jnp.float32),
        grid=(T,),
        in_specs=[
            pl.BlockSpec((1, B, In1), lambda t: (t, 0, 0)),    # x_t tile per step
            pl.BlockSpec(P.shape, lambda t: (0, 0)),           # params: resident
            pl.BlockSpec(state0.shape, lambda t: (0, 0)),      # init state: resident
        ],
        out_specs=pl.BlockSpec((1, B, S), lambda t: (t, 0, 0)),
        scratch_shapes=[pltpu.VMEM((B, S), jnp.float32)],      # carried (h, c) state
        compiler_params=pltpu.CompilerParams(
            dimension_semantics=("arbitrary",)),               # sequential recurrence
        cost_estimate=pl.CostEstimate(flops=flops, transcendentals=transc,
                                      bytes_accessed=bytes_accessed),
    )(x_seq, P, state0)


# ----------------------------------------------------------------------------
# State slab pack / unpack (slab layout == kernel output layout)
# ----------------------------------------------------------------------------
def _pack_state(h_00, h_10, enc_state, n2, S):
    parts = [h_00[0], h_00[1], h_10[0]]
    if n2 == 2:
        parts.append(enc_state[0])
    parts.append(h_10[1])
    if n2 == 2:
        parts.append(enc_state[1])
    slab = jnp.concatenate(parts, axis=1).astype(jnp.float32)
    pad = S - slab.shape[1]
    return jnp.pad(slab, ((0, 0), (0, pad))) if pad else slab


def _split_state(slab, H1, H2, n2):
    R2 = n2 * H2
    h01 = slab[..., 0:H1]
    c01 = slab[..., H1:2 * H1]
    h11 = slab[..., 2 * H1:2 * H1 + H2]
    c11 = slab[..., 2 * H1 + R2:2 * H1 + R2 + H2]
    if n2 == 2:
        hen = slab[..., 2 * H1 + H2:2 * H1 + 2 * H2]
        cen = slab[..., 2 * H1 + R2 + H2:2 * H1 + R2 + 2 * H2]
        return h01, c01, h11, c11, hen, cen
    return h01, c01, h11, c11


# ----------------------------------------------------------------------------
# Public forward APIs
# ----------------------------------------------------------------------------
def ame_forward(params, inp, h_00, h_10, enc=False):
    """Single step; matches AME.forward exactly (T=1 of the sequence kernel)."""
    with_enc = (enc is not False) and (enc is not None)
    dims = params["dims"]
    H1, H2 = dims["nhid1"], dims["nhid2"]
    variant = params["enc"] if with_enc else params["noenc"]
    n2 = variant["n2"]
    S = _round_up(2 * H1 + 2 * n2 * H2, 128)
    state0 = _pack_state(h_00, h_10, enc if with_enc else None, n2, S)
    out = _run_ame(variant, dims, inp[None].astype(jnp.float32), state0)[0]
    if with_enc:
        h01, c01, h11, c11, hen, cen = _split_state(out, H1, H2, n2)
        return (h11, hen, (h01, c01), (h11, c11), (hen, cen))
    h01, c01, h11, c11 = _split_state(out, H1, H2, n2)
    return (h11, (h01, c01), (h11, c11))


def ame_forward_seq(params, x_seq, h_00, h_10, enc=False):
    """Apply AME.forward over T timesteps inside ONE pallas_call, carrying
    h_00 <- (h_01, c_01), h_10 <- (h_11, c_11), enc <- (h_enc, c_enc).
    Returns per-step h_11 (and h_enc) plus the final state tuples."""
    with_enc = (enc is not False) and (enc is not None)
    dims = params["dims"]
    H1, H2 = dims["nhid1"], dims["nhid2"]
    variant = params["enc"] if with_enc else params["noenc"]
    n2 = variant["n2"]
    S = _round_up(2 * H1 + 2 * n2 * H2, 128)
    state0 = _pack_state(h_00, h_10, enc if with_enc else None, n2, S)
    out = _run_ame(variant, dims, x_seq.astype(jnp.float32), state0)  # (T, B, S)
    if with_enc:
        h01, c01, h11, c11, hen, cen = _split_state(out, H1, H2, n2)
        return (h11, hen, (h01[-1], c01[-1]), (h11[-1], c11[-1]), (hen[-1], cen[-1]))
    h01, c01, h11, c11 = _split_state(out, H1, H2, n2)
    return (h11, (h01[-1], c01[-1]), (h11[-1], c11[-1]))


# ----------------------------------------------------------------------------
# Pure-JAX reference (PyTorch gate order) for validation
# ----------------------------------------------------------------------------
def _lstm_cell_ref(x, h, c, w_ih_t, w_hh_t, bias):
    gates = x @ w_ih_t + h @ w_hh_t + bias
    H = h.shape[1]
    i = jax.nn.sigmoid(gates[:, 0 * H:1 * H])
    f = jax.nn.sigmoid(gates[:, 1 * H:2 * H])
    g = jnp.tanh(gates[:, 2 * H:3 * H])
    o = jax.nn.sigmoid(gates[:, 3 * H:4 * H])
    c_new = f * c + i * g
    return o * jnp.tanh(c_new), c_new


def _ame_ref_step(params, x, h_00, h_10, enc_state=None):
    p1, p21, p22 = params["lstm1"], params["lstm21"], params["lstm22"]
    h01, c01 = _lstm_cell_ref(x, h_00[0], h_00[1],
                              p1["w_ih_t"], p1["w_hh_t"], p1["bias"])
    h11, c11 = _lstm_cell_ref(h01, h_10[0], h_10[1],
                              p21["w_ih_t"], p21["w_hh_t"], p21["bias"])
    if enc_state is None:
        return (h01, c01), (h11, c11), None
    hen, cen = _lstm_cell_ref(h01, enc_state[0], enc_state[1],
                              p22["w_ih_t"], p22["w_hh_t"], p22["bias"])
    return (h01, c01), (h11, c11), (hen, cen)


if __name__ == "__main__":
    B, T = 8, 8
    ninp1, nhid1 = 16, 32
    ninp2, nhid2 = 32, 32   # lstm21/lstm22 consume h_01, so ninp2 == nhid1

    key = jax.random.PRNGKey(0)
    kp, kx, kh0, kc0, kh1, kc1, khe, kce = jax.random.split(key, 8)

    params_bf16 = make_ame_params(kp, ninp1, nhid1, ninp2, nhid2, jnp.bfloat16)
    params_f32 = make_ame_params(kp, ninp1, nhid1, ninp2, nhid2, jnp.float32)

    x_seq = jax.random.normal(kx, (T, B, ninp1), jnp.float32)
    x = x_seq[0]
    h_00 = (jax.random.normal(kh0, (B, nhid1), jnp.float32),
            jax.random.normal(kc0, (B, nhid1), jnp.float32))
    h_10 = (jax.random.normal(kh1, (B, nhid2), jnp.float32),
            jax.random.normal(kc1, (B, nhid2), jnp.float32))
    enc0 = (jax.random.normal(khe, (B, nhid2), jnp.float32),
            jax.random.normal(kce, (B, nhid2), jnp.float32))

    # ---------------- single-step reference ----------------
    (h01_r, c01_r), (h11_r, c11_r), (hen_r, cen_r) = _ame_ref_step(
        params_f32, x, h_00, h_10, enc0)

    # ---------------- single step, f32 weights (tight check) ----------------
    h11, (h01, c01), (_, c11) = jax.block_until_ready(
        ame_forward(params_f32, x, h_00, h_10, enc=False))
    for got, ref, name in ((h01, h01_r, "h_01"), (c01, c01_r, "c_01"),
                           (h11, h11_r, "h_11"), (c11, c11_r, "c_11")):
        assert jnp.allclose(got, ref, atol=2e-5), f"f32 step {name} mismatch"

    out_e = jax.block_until_ready(ame_forward(params_f32, x, h_00, h_10, enc=enc0))
    h11e, hene, (h01e, c01e), (_, c11e), (_, cene) = out_e
    for got, ref, name in ((h01e, h01_r, "h_01"), (c01e, c01_r, "c_01"),
                           (h11e, h11_r, "h_11"), (c11e, c11_r, "c_11"),
                           (hene, hen_r, "h_enc"), (cene, cen_r, "c_enc")):
        assert jnp.allclose(got, ref, atol=2e-5), f"f32 enc step {name} mismatch"

    # ---------------- single step, bf16 weights (quantization tolerance) ----
    out_b = jax.block_until_ready(ame_forward(params_bf16, x, h_00, h_10, enc=enc0))
    h11b, henb, (h01b, c01b), (_, c11b), (_, cenb) = out_b
    for got, ref, name in ((h01b, h01_r, "h_01"), (c01b, c01_r, "c_01"),
                           (h11b, h11_r, "h_11"), (c11b, c11_r, "c_11"),
                           (henb, hen_r, "h_enc"), (cenb, cen_r, "c_enc")):
        assert jnp.allclose(got, ref, atol=1e-1), f"bf16 step {name} mismatch"

    # ---------------- T-step sequence in ONE pallas_call --------------------
    s00, s10, sen = h_00, h_10, enc0
    h11_seq_r, hen_seq_r = [], []
    for t in range(T):
        s00, s10, sen = _ame_ref_step(params_f32, x_seq[t], s00, s10, sen)
        h11_seq_r.append(s10[0])
        hen_seq_r.append(sen[0])
    h11_seq_r = jnp.stack(h11_seq_r)
    hen_seq_r = jnp.stack(hen_seq_r)

    seq_f32 = jax.block_until_ready(
        ame_forward_seq(params_f32, x_seq, h_00, h_10, enc=enc0))
    h11_seq, hen_seq, (h01_T, c01_T), (h11_T, c11_T), (hen_T, cen_T) = seq_f32
    assert jnp.allclose(h11_seq, h11_seq_r, atol=5e-4), "f32 seq h_11 mismatch"
    assert jnp.allclose(hen_seq, hen_seq_r, atol=5e-4), "f32 seq h_enc mismatch"
    assert jnp.allclose(h01_T, s00[0], atol=5e-4), "f32 seq final h_01 mismatch"
    assert jnp.allclose(c01_T, s00[1], atol=5e-4), "f32 seq final c_01 mismatch"
    assert jnp.allclose(c11_T, s10[1], atol=5e-4), "f32 seq final c_11 mismatch"
    assert jnp.allclose(cen_T, sen[1], atol=5e-4), "f32 seq final c_enc mismatch"

    seq_bf16 = jax.block_until_ready(
        ame_forward_seq(params_bf16, x_seq, h_00, h_10, enc=enc0))
    assert jnp.allclose(seq_bf16[0], h11_seq_r, atol=1e-1), "bf16 seq h_11 mismatch"
    assert jnp.allclose(seq_bf16[1], hen_seq_r, atol=1e-1), "bf16 seq h_enc mismatch"

    # non-enc sequence path (lstm1/lstm21 trajectories are unaffected by lstm22)
    seq_ne = jax.block_until_ready(
        ame_forward_seq(params_bf16, x_seq, h_00, h_10, enc=False))
    assert jnp.allclose(seq_ne[0], h11_seq_r, atol=1e-1), "bf16 no-enc seq mismatch"

    print("KERNEL_OK")
</pallas_src>

<mosaic_0001>
module attributes {stable_mosaic.version = 11 : i64} {
  func.func @_ame_seq_kernel(%arg0: i32, %arg1: memref<1x8x16xf32, #tpu.memory_space<vmem>>, %arg2: memref<128x128xf32, #tpu.memory_space<vmem>>, %arg3: memref<8x128xf32, #tpu.memory_space<vmem>>, %arg4: memref<1x8x128xf32, #tpu.memory_space<vmem>>, %arg5: memref<8x128xf32, #tpu.memory_space<vmem>>) attributes {dimension_semantics = [#tpu.dimension_semantics<arbitrary>], iteration_bounds = array<i64: 1>, scalar_prefetch = 0 : i64, scratch_operands = 1 : i64, tpu.core_type = #tpu.core_type<tc>, window_params = [{transform_indices = @transform_0, window_bounds = array<i64: 1, 8, 16>}, {pipeline_mode = #tpu.pipeline_mode<synchronous>, transform_indices = @transform_1, window_bounds = array<i64: 128, 128>}, {pipeline_mode = #tpu.pipeline_mode<synchronous>, transform_indices = @transform_2, window_bounds = array<i64: 8, 128>}, {transform_indices = @transform_3, window_bounds = array<i64: 1, 8, 128>}]} {
    %c0_i32 = arith.constant 0 : i32
    %0 = arith.cmpi eq, %arg0, %c0_i32 : i32
    %1 = arith.extui %0 : i1 to i32
    %c0_i32_0 = arith.constant 0 : i32
    %2 = arith.cmpi ne, %1, %c0_i32_0 : i32
    scf.if %2 {
      %c0_33 = arith.constant 0 : index
      %c0_34 = arith.constant 0 : index
      %65 = vector.load %arg3[%c0_33, %c0_34] : memref<8x128xf32, #tpu.memory_space<vmem>>, vector<8x128xf32>
      %c0_35 = arith.constant 0 : index
      %c0_36 = arith.constant 0 : index
      %66 = vector.load %arg5[%c0_35, %c0_36] : memref<8x128xf32, #tpu.memory_space<vmem>>, vector<8x128xf32>
      tpu.vector_store %arg5[%c0_35, %c0_36], %65 {strides = array<i32>} : memref<8x128xf32, #tpu.memory_space<vmem>>, vector<8x128xf32>,
    } else {
    }
    %c0 = arith.constant 0 : index
    %c0_1 = arith.constant 0 : index
    %3 = vector.load %arg5[%c0, %c0_1] : memref<8x128xf32, #tpu.memory_space<vmem>>, vector<8x32xf32>
    %c0_2 = arith.constant 0 : index
    %c32 = arith.constant 32 : index
    %4 = vector.load %arg5[%c0_2, %c32] : memref<8x128xf32, #tpu.memory_space<vmem>>, vector<8x32xf32>
    %c0_3 = arith.constant 0 : index
    %c0_4 = arith.constant 0 : index
    %c0_5 = arith.constant 0 : index
    %5 = vector.load %arg1[%c0_3, %c0_4, %c0_5] : memref<1x8x16xf32, #tpu.memory_space<vmem>>, vector<1x8x16xf32>
    %6 = vector.shape_cast %5 : vector<1x8x16xf32> to vector<8x16xf32>
    %c0_6 = arith.constant 0 : index
    %c0_7 = arith.constant 0 : index
    %7 = vector.load %arg2[%c0_6, %c0_7] : memref<128x128xf32, #tpu.memory_space<vmem>>, vector<16x128xf32>
    %cst = arith.constant dense<0.000000e+00> : vector<8x128xf32>
    %8 = tpu.matmul %6, %7, %cst {dimension_numbers = #tpu.dot_dimension_numbers<[1], [0], [0], [1], [0, 0, 1, 1], [], []>} : vector<8x16xf32>, vector<16x128xf32>, vector<8x128xf32> -> vector<8x128xf32>
    %c16 = arith.constant 16 : index
    %c0_8 = arith.constant 0 : index
    %9 = vector.load %arg2[%c16, %c0_8] : memref<128x128xf32, #tpu.memory_space<vmem>>, vector<32x128xf32>
    %cst_9 = arith.constant dense<0.000000e+00> : vector<8x128xf32>
    %10 = tpu.matmul %3, %9, %cst_9 {dimension_numbers = #tpu.dot_dimension_numbers<[1], [0], [0], [1], [0, 0, 1, 1], [], []>} : vector<8x32xf32>, vector<32x128xf32>, vector<8x128xf32> -> vector<8x128xf32>
    %11 = arith.addf %8, %10 : vector<8x128xf32>
    %c48 = arith.constant 48 : index
    %c0_10 = arith.constant 0 : index
    %12 = vector.load %arg2[%c48, %c0_10] : memref<128x128xf32, #tpu.memory_space<vmem>>, vector<1x128xf32>
    %13 = vector.broadcast %12 : vector<1x128xf32> to vector<8x128xf32>
    %14 = arith.addf %11, %13 : vector<8x128xf32>
    %15 = vector.extract_strided_slice %14 {offsets = [0, 0], sizes = [8, 96], strides = [1, 1]} : vector<8x128xf32> to vector<8x96xf32>
    %16 = arith.negf %15 : vector<8x96xf32>
    %17 = math.exp %16 : vector<8x96xf32>
    %cst_11 = arith.constant 1.000000e+00 : f32
    %18 = vector.broadcast %cst_11 : f32 to vector<8x96xf32>
    %19 = arith.addf %18, %17 : vector<8x96xf32>
    %20 = arith.divf %18, %19 : vector<8x96xf32>
    %21 = vector.extract_strided_slice %14 {offsets = [0, 96], sizes = [8, 32], strides = [1, 1]} : vector<8x128xf32> to vector<8x32xf32>
    %22 = math.tanh %21 : vector<8x32xf32>
    %23 = vector.extract_strided_slice %20 {offsets = [0, 0], sizes = [8, 32], strides = [1, 1]} : vector<8x96xf32> to vector<8x32xf32>
    %24 = vector.extract_strided_slice %20 {offsets = [0, 32], sizes = [8, 32], strides = [1, 1]} : vector<8x96xf32> to vector<8x32xf32>
    %25 = vector.extract_strided_slice %20 {offsets = [0, 64], sizes = [8, 32], strides = [1, 1]} : vector<8x96xf32> to vector<8x32xf32>
    %26 = arith.mulf %24, %4 : vector<8x32xf32>
    %27 = arith.mulf %23, %22 : vector<8x32xf32>
    %28 = arith.addf %26, %27 : vector<8x32xf32>
    %29 = math.tanh %28 : vector<8x32xf32>
    %30 = arith.mulf %25, %29 : vector<8x32xf32>
    %c0_12 = arith.constant 0 : index
    %c64 = arith.constant 64 : index
    %31 = vector.load %arg5[%c0_12, %c64] : memref<8x128xf32, #tpu.memory_space<vmem>>, vector<8x32xf32>
    %c0_13 = arith.constant 0 : index
    %c96 = arith.constant 96 : index
    %32 = vector.load %arg5[%c0_13, %c96] : memref<8x128xf32, #tpu.memory_space<vmem>>, vector<8x32xf32>
    %c56 = arith.constant 56 : index
    %c0_14 = arith.constant 0 : index
    %33 = vector.load %arg2[%c56, %c0_14] : memref<128x128xf32, #tpu.memory_space<vmem>>, vector<32x128xf32>
    %cst_15 = arith.constant dense<0.000000e+00> : vector<8x128xf32>
    %34 = tpu.matmul %30, %33, %cst_15 {dimension_numbers = #tpu.dot_dimension_numbers<[1], [0], [0], [1], [0, 0, 1, 1], [], []>} : vector<8x32xf32>, vector<32x128xf32>, vector<8x128xf32> -> vector<8x128xf32>
    %c88 = arith.constant 88 : index
    %c0_16 = arith.constant 0 : index
    %35 = vector.load %arg2[%c88, %c0_16] : memref<128x128xf32, #tpu.memory_space<vmem>>, vector<32x128xf32>
    %cst_17 = arith.constant dense<0.000000e+00> : vector<8x128xf32>
    %36 = tpu.matmul %31, %35, %cst_17 {dimension_numbers = #tpu.dot_dimension_numbers<[1], [0], [0], [1], [0, 0, 1, 1], [], []>} : vector<8x32xf32>, vector<32x128xf32>, vector<8x128xf32> -> vector<8x128xf32>
    %37 = arith.addf %34, %36 : vector<8x128xf32>
    %c120 = arith.constant 120 : index
    %c0_18 = arith.constant 0 : index
    %38 = vector.load %arg2[%c120, %c0_18] : memref<128x128xf32, #tpu.memory_space<vmem>>, vector<1x128xf32>
    %39 = vector.broadcast %38 : vector<1x128xf32> to vector<8x128xf32>
    %40 = arith.addf %37, %39 : vector<8x128xf32>
    %41 = vector.extract_strided_slice %40 {offsets = [0, 0], sizes = [8, 96], strides = [1, 1]} : vector<8x128xf32> to vector<8x96xf32>
    %42 = arith.negf %41 : vector<8x96xf32>
    %43 = math.exp %42 : vector<8x96xf32>
    %cst_19 = arith.constant 1.000000e+00 : f32
    %44 = vector.broadcast %cst_19 : f32 to vector<8x96xf32>
    %45 = arith.addf %44, %43 : vector<8x96xf32>
    %46 = arith.divf %44, %45 : vector<8x96xf32>
    %47 = vector.extract_strided_slice %40 {offsets = [0, 96], sizes = [8, 32], strides = [1, 1]} : vector<8x128xf32> to vector<8x32xf32>
    %48 = math.tanh %47 : vector<8x32xf32>
    %49 = vector.extract_strided_slice %46 {offsets = [0, 0], sizes = [8, 32], strides = [1, 1]} : vector<8x96xf32> to vector<8x32xf32>
    %50 = vector.extract_strided_slice %46 {offsets = [0, 32], sizes = [8, 32], strides = [1, 1]} : vector<8x96xf32> to vector<8x32xf32>
    %51 = vector.extract_strided_slice %46 {offsets = [0, 64], sizes = [8, 32], strides = [1, 1]} : vector<8x96xf32> to vector<8x32xf32>
    %52 = arith.mulf %50, %32 : vector<8x32xf32>
    %53 = arith.mulf %49, %48 : vector<8x32xf32>
    %54 = arith.addf %52, %53 : vector<8x32xf32>
    %55 = math.tanh %54 : vector<8x32xf32>
    %56 = arith.mulf %51, %55 : vector<8x32xf32>
    %c0_20 = arith.constant 0 : index
    %c0_21 = arith.constant 0 : index
    %57 = vector.load %arg5[%c0_20, %c0_21] : memref<8x128xf32, #tpu.memory_space<vmem>>, vector<8x32xf32>
    tpu.vector_store %arg5[%c0_20, %c0_21], %30 {strides = array<i32>} : memref<8x128xf32, #tpu.memory_space<vmem>>, vector<8x32xf32>,
    %c0_22 = arith.constant 0 : index
    %c32_23 = arith.constant 32 : index
    %58 = vector.load %arg5[%c0_22, %c32_23] : memref<8x128xf32, #tpu.memory_space<vmem>>, vector<8x32xf32>
    tpu.vector_store %arg5[%c0_22, %c32_23], %28 {strides = array<i32>} : memref<8x128xf32, #tpu.memory_space<vmem>>, vector<8x32xf32>,
    %c0_24 = arith.constant 0 : index
    %c64_25 = arith.constant 64 : index
    %59 = vector.load %arg5[%c0_24, %c64_25] : memref<8x128xf32, #tpu.memory_space<vmem>>, vector<8x32xf32>
    tpu.vector_store %arg5[%c0_24, %c64_25], %56 {strides = array<i32>} : memref<8x128xf32, #tpu.memory_space<vmem>>, vector<8x32xf32>,
    %c0_26 = arith.constant 0 : index
    %c96_27 = arith.constant 96 : index
    %60 = vector.load %arg5[%c0_26, %c96_27] : memref<8x128xf32, #tpu.memory_space<vmem>>, vector<8x32xf32>
    tpu.vector_store %arg5[%c0_26, %c96_27], %54 {strides = array<i32>} : memref<8x128xf32, #tpu.memory_space<vmem>>, vector<8x32xf32>,
    %c0_28 = arith.constant 0 : index
    %c0_29 = arith.constant 0 : index
    %61 = vector.load %arg5[%c0_28, %c0_29] : memref<8x128xf32, #tpu.memory_space<vmem>>, vector<8x128xf32>
    %c0_30 = arith.constant 0 : index
    %c0_31 = arith.constant 0 : index
    %c0_32 = arith.constant 0 : index
    %62 = vector.load %arg4[%c0_30, %c0_31, %c0_32] : memref<1x8x128xf32, #tpu.memory_space<vmem>>, vector<1x8x128xf32>
    %63 = vector.shape_cast %62 : vector<1x8x128xf32> to vector<8x128xf32>
    %64 = vector.shape_cast %61 : vector<8x128xf32> to vector<1x8x128xf32>
    tpu.vector_store %arg4[%c0_30, %c0_31, %c0_32], %64 {strides = array<i32>} : memref<1x8x128xf32, #tpu.memory_space<vmem>>, vector<1x8x128xf32>,
    return
  }
  func.func @transform_0(%arg0: i32) -> (i32, i32, i32) {
    %c0_i32 = arith.constant 0 : i32
    %c0_i32_0 = arith.constant 0 : i32
    %c0_i32_1 = arith.constant 0 : i32
    return %arg0, %c0_i32, %c0_i32_0 : i32, i32, i32
  }
  func.func @transform_1(%arg0: i32) -> (i32, i32) {
    %c0_i32 = arith.constant 0 : i32
    %c0_i32_0 = arith.constant 0 : i32
    %c0_i32_1 = arith.constant 0 : i32
    return %c0_i32, %c0_i32_0 : i32, i32
  }
  func.func @transform_2(%arg0: i32) -> (i32, i32) {
    %c0_i32 = arith.constant 0 : i32
    %c0_i32_0 = arith.constant 0 : i32
    %c0_i32_1 = arith.constant 0 : i32
    return %c0_i32, %c0_i32_0 : i32, i32
  }
  func.func @transform_3(%arg0: i32) -> (i32, i32, i32) {
    %c0_i32 = arith.constant 0 : i32
    %c0_i32_0 = arith.constant 0 : i32
    %c0_i32_1 = arith.constant 0 : i32
    return %arg0, %c0_i32, %c0_i32_0 : i32, i32, i32
  }
}

</mosaic_0001>

<llo_original>
// kernel: tpu_custom_call.1
$region0: #{tpu_custom_call.1}
  #allocation0 [shape = 'u32[]', space=smem, size = 0x4, offset = 0x4, fixed_abs, tag = 'smem constant byte address 0x4 - core index']
  #allocation1 [shape = 'u32[144,128]{1,0:T(1,128)}', space=vmem, size = 0x12000, scoped, tag = 'internal scratch']
  #allocation2 [shape = 'f32[8,128]{1,0:T(8,128)}', space=vmem, size = 0x1000, scoped, tag = 'scratch operand']
  %s0 = inlined_call_operand.hbm [shape: f32[1,8,16], index: 0, kind: input, shape index: {}]
  %s1 = inlined_call_operand.hbm [shape: f32[128,128], index: 1, kind: input, shape index: {}]
  %s2 = inlined_call_operand.hbm [shape: f32[8,128], index: 2, kind: input, shape index: {}]
  %s3 = inlined_call_operand.hbm [shape: f32[1,8,128], index: 3, kind: output, shape index: {}]
  %s4 = sld [smem:[#allocation0]]
  $region38: #{tpu_custom_call.1} parent=0
    _
  %s6 = ssub.s32 1, %s4
  %s7 = scalar_select 0, %s6, %s4
  $region1: #{tpu_custom_call.1} parent=0
    #allocation3 [shape = 'u8[4096]{0}', space=vmem, size = 0x1000, scoped, tag = 'input window, operand 0, single buffered']
    #allocation4 [shape = 's32[1]{0}', space=sflag, size = 0x4, scoped, tag = 'scoped memory for tpu_custom_call.1']
    #allocation5 [shape = 's32[1]{0}', space=sflag, size = 0x4, scoped, tag = 'scoped memory for tpu_custom_call.1']
    #allocation6 [shape = 'u8[65536]{0}', space=vmem, size = 0x10000, scoped, tag = 'input window, operand 1, single buffered']
    #allocation7 [shape = 's32[1]{0}', space=sflag, size = 0x4, scoped, tag = 'scoped memory for tpu_custom_call.1']
    #allocation8 [shape = 'u8[4096]{0}', space=vmem, size = 0x1000, scoped, tag = 'input window, operand 2, single buffered']
    #allocation9 [shape = 'u8[4096]{0}', space=vmem, size = 0x1000, scoped, tag = 'output window, operand 0, single buffered']
    %8 = vsyncpa [#allocation4], 0
    %9 = vsyncpa [#allocation7], 0
    %10 = vsyncpa [#allocation5], 0
    // Predicated region
    $region2: #{tpu_custom_call.1} parent=1 // pred_check
      _
    $region3: #{tpu_custom_call.1} parent=1 // pred_check_branch
      %12 = sbr.rel (0) target = $region5
    $region4: #{tpu_custom_call.1} parent=1 // pred_region
      %s14 = ssub.s32 128, 128
      %15 = vsyncadd [#allocation4], %s14
      %s17 = sshll.u32 [#allocation3], 4
      %s18 = int_to_ptr.vmem [resolvable:$true] %s17
      %20 = dma.hbm_to_vmem [thread:$0]  %s0, 128, %s18, [#allocation4]
    $region5: #{tpu_custom_call.1} parent=1 // pred_fallthru
      _
    // Predicated region
    $region6: #{tpu_custom_call.1} parent=1 // pred_check
      _
    $region7: #{tpu_custom_call.1} parent=1 // pred_check_branch
      %22 = sbr.rel (0) target = $region9
    $region8: #{tpu_custom_call.1} parent=1 // pred_region
      %s24 = ssub.s32 2048, 2048
      %25 = vsyncadd [#allocation7], %s24
      %s26 = sshll.u32 [#allocation6], 4
      %s27 = int_to_ptr.vmem [resolvable:$true] %s26
      %32 = dma.hbm_to_vmem [thread:$0]  %s1, 2048, %s27, [#allocation7], 128, 128, 8
    $region9: #{tpu_custom_call.1} parent=1 // pred_fallthru
      _
    // Predicated region
    $region10: #{tpu_custom_call.1} parent=1 // pred_check
      _
    $region11: #{tpu_custom_call.1} parent=1 // pred_check_branch
      %34 = sbr.rel (0) target = $region13
    $region12: #{tpu_custom_call.1} parent=1 // pred_region
      %s36 = ssub.s32 128, 128
      %37 = vsyncadd [#allocation7], %s36
      %s39 = sshll.u32 [#allocation8], 4
      %s40 = int_to_ptr.vmem [resolvable:$true] %s39
      %42 = dma.hbm_to_vmem [thread:$0]  %s2, 128, %s40, [#allocation7]
    $region13: #{tpu_custom_call.1} parent=1 // pred_fallthru
      _
    // Predicated region
    $region14: #{tpu_custom_call.1} parent=1 // pred_check
      _
    $region15: #{tpu_custom_call.1} parent=1 // pred_check_branch
      %44 = sbr.rel (0) target = $region17
    $region16: #{tpu_custom_call.1} parent=1 // pred_region
      %45 = dma.done [#allocation4], 128
    $region17: #{tpu_custom_call.1} parent=1 // pred_fallthru
      _
    // Predicated region
    $region18: #{tpu_custom_call.1} parent=1 // pred_check
      _
    $region19: #{tpu_custom_call.1} parent=1 // pred_check_branch
      %47 = sbr.rel (0) target = $region21
    $region20: #{tpu_custom_call.1} parent=1 // pred_region
      %48 = dma.done [#allocation7], 2048
    $region21: #{tpu_custom_call.1} parent=1 // pred_fallthru
      _
    // Predicated region
    $region22: #{tpu_custom_call.1} parent=1 // pred_check
      _
    $region23: #{tpu_custom_call.1} parent=1 // pred_check_branch
      %50 = sbr.rel (0) target = $region25
    $region24: #{tpu_custom_call.1} parent=1 // pred_region
      %51 = dma.done [#allocation7], 128
    $region25: #{tpu_custom_call.1} parent=1 // pred_fallthru
      _
    %p52 = scmp.eq.s32.totalorder 0, 0
    // Predicated region
    $region26: #{tpu_custom_call.1} parent=1 // pred_check
      %p53 = pneg %p52
    $region27: #{tpu_custom_call.1} parent=1 // pred_check_branch
      %55 = sbr.rel (%p53) target = $region29
    $region28: #{tpu_custom_call.1} parent=1 // pred_region
      %v56 = vld [vmem:[#allocation8] sm:$0xff]
      %57 = vst [vmem:[#allocation2] sm:$0xff] %v56
    $region29: #{tpu_custom_call.1} parent=1 // pred_fallthru
      _
    %v58 = vld [vmem:[#allocation2] sm:$0xff]
    %v59 = vld [vmem:[#allocation3] sm:$0xff]
    %v60 = vld [vmem:[#allocation6] sm:$0xff]
    %v61 = vld [vmem:[#allocation6 + $0x8] sm:$0xff]
    %v62 = vld [vmem:[#allocation6 + $0x10] sm:$0xff]
    %v63 = vld [vmem:[#allocation6 + $0x18] sm:$0xff]
    %v64 = vld [vmem:[#allocation6 + $0x20] sm:$0xff]
    %v65 = vld [vmem:[#allocation6 + $0x28] sm:$0xff]
    %vm66 = vcmask 261120
    %v68 = vsel %vm66, %v58, 0
    %70 = vmatprep.subr.mxu0 0.0
    %71 = vmatpush1.msra.mxu0 %v62
    %72 = vmatprep.subr.mxu0 0.0
    %73 = vmatpush1.msra.mxu0 %v63
    %74 = vmatprep.subr.mxu0 0.0
    %75 = vmatpush1.msra.mxu0 %v64
    %76 = vmatprep.subr.mxu0 0.0
    %77 = vmatpush1.msra.mxu0 %v65
    %78 = vmatprep.subr.mxu0 0.0
    %79 = vmatpush1.msra.mxu0 0.0
    %80 = vmatprep.subr.mxu0 0.0
    %81 = vmatpush1.msra.mxu0 0.0
    %82 = vmatprep.subr.mxu0 0.0
    %83 = vmatpush1.msra.mxu0 0.0
    %84 = vmatprep.subr.mxu0 0.0
    %85 = vmatpush1.msra.mxu0 0.0
    %86 = vmatprep.subr.mxu0 0.0
    %87 = vmatpush1.msra.mxu0 0.0
    %88 = vmatprep.subr.mxu0 0.0
    %89 = vmatpush1.msra.mxu0 0.0
    %90 = vmatprep.subr.mxu0 0.0
    %91 = vmatpush1.msra.mxu0 0.0
    %92 = vmatprep.subr.mxu0 0.0
    %93 = vmatpush1.msra.mxu0 0.0
    %94 = vmatprep.subr.mxu0 0.0
    %95 = vmatpush1.msra.mxu0 0.0
    %96 = vmatprep.subr.mxu0 0.0
    %97 = vmatpush1.msra.mxu0 0.0
    %98 = vmatprep.subr.mxu0 0.0
    %99 = vmatpush1.msra.mxu0 0.0
    %100 = vmatprep.subr.mxu0 0.0
    %101 = vmatpush1.msra.mxu0 0.0
    %102 = vmatprep.subr.mxu0 0.0
    %103 = vmatpush1.msra.mxu0 0.0
    %104 = vmatprep.subr.mxu0 0.0
    %105 = vmatpush1.msra.mxu0 0.0
    %106 = vmatprep.subr.mxu0 0.0
    %107 = vmatpush1.msra.mxu0 0.0
    %108 = vmatprep.subr.mxu0 0.0
    %109 = vmatpush1.msra.mxu0 0.0
    %110 = vmatprep.subr.mxu0 0.0
    %111 = vmatpush1.msra.mxu0 0.0
    %112 = vmatprep.subr.mxu0 0.0
    %113 = vmatpush1.msra.mxu0 0.0
    %114 = vmatprep.subr.mxu0 0.0
    %115 = vmatpush1.msra.mxu0 0.0
    %116 = vmatprep.subr.mxu0 0.0
    %117 = vmatpush1.msra.mxu0 0.0
    %118 = vmatprep.subr.mxu0 0.0
    %119 = vmatpush1.msra.mxu0 0.0
    %120 = vmatprep.subr.mxu0 0.0
    %121 = vmatpush1.msra.mxu0 0.0
    %122 = vmatprep.subr.mxu0 0.0
    %123 = vmatpush1.msra.mxu0 0.0
    %124 = vmatprep.subr.mxu0 0.0
    %125 = vmatpush1.msra.mxu0 0.0
    %126 = vmatprep.subr.mxu0 0.0
    %127 = vmatpush1.msra.mxu0 0.0
    %128 = vmatprep.subr.mxu0 0.0
    %129 = vmatpush1.msra.mxu0 0.0
    %130 = vmatprep.subr.mxu0 0.0
    %131 = vmatpush1.msra.mxu0 0.0
    %132 = vmatprep.subr.mxu0 0.0
    %133 = vmatpush1.msra.mxu0 0.0
    %134 = vmatprep.mubr.f32.mxu0 0.0
    %135 = vmatmul.mubr.f32.gmra.mrb[0].mxu0 %v68
    %v136 = vpop.f32.mrb[0].mxu0
    %v137 = vadd.f32 0.0, %v136
    %v138 = vpop.f32.mrb[0].mxu0
    %139 = vdwg.mxu0
    %vm140 = vcmask 130048
    %v142 = vsel %vm140, %v59, 0
    %144 = vmatprep.subr.mxu0 0.0
    %145 = vmatpush1.msra.mxu0 %v60
    %146 = vmatprep.subr.mxu0 0.0
    %147 = vmatpush1.msra.mxu0 %v61
    %148 = vmatprep.subr.mxu0 0.0
    %149 = vmatpush1.msra.mxu0 0.0
    %150 = vmatprep.subr.mxu0 0.0
    %151 = vmatpush1.msra.mxu0 0.0
    %152 = vmatprep.subr.mxu0 0.0
    %153 = vmatpush1.msra.mxu0 0.0
    %154 = vmatprep.subr.mxu0 0.0
    %155 = vmatpush1.msra.mxu0 0.0
    %156 = vmatprep.subr.mxu0 0.0
    %157 = vmatpush1.msra.mxu0 0.0
    %158 = vmatprep.subr.mxu0 0.0
    %159 = vmatpush1.msra.mxu0 0.0
    %160 = vmatprep.subr.mxu0 0.0
    %161 = vmatpush1.msra.mxu0 0.0
    %162 = vmatprep.subr.mxu0 0.0
    %163 = vmatpush1.msra.mxu0 0.0
    %164 = vmatprep.subr.mxu0 0.0
    %165 = vmatpush1.msra.mxu0 0.0
    %166 = vmatprep.subr.mxu0 0.0
    %167 = vmatpush1.msra.mxu0 0.0
    %168 = vmatprep.subr.mxu0 0.0
    %169 = vmatpush1.msra.mxu0 0.0
    %170 = vmatprep.subr.mxu0 0.0
    %171 = vmatpush1.msra.mxu0 0.0
    %172 = vmatprep.subr.mxu0 0.0
    %173 = vmatpush1.msra.mxu0 0.0
    %174 = vmatprep.subr.mxu0 0.0
    %175 = vmatpush1.msra.mxu0 0.0
    %176 = vmatprep.subr.mxu0 0.0
    %177 = vmatpush1.msra.mxu0 0.0
    %178 = vmatprep.subr.mxu0 0.0
    %179 = vmatpush1.msra.mxu0 0.0
    %180 = vmatprep.subr.mxu0 0.0
    %181 = vmatpush1.msra.mxu0 0.0
    %182 = vmatprep.subr.mxu0 0.0
    %183 = vmatpush1.msra.mxu0 0.0
    %184 = vmatprep.subr.mxu0 0.0
    %185 = vmatpush1.msra.mxu0 0.0
    %186 = vmatprep.subr.mxu0 0.0
    %187 = vmatpush1.msra.mxu0 0.0
    %188 = vmatprep.subr.mxu0 0.0
    %189 = vmatpush1.msra.mxu0 0.0
    %190 = vmatprep.subr.mxu0 0.0
    %191 = vmatpush1.msra.mxu0 0.0
    %192 = vmatprep.subr.mxu0 0.0
    %193 = vmatpush1.msra.mxu0 0.0
    %194 = vmatprep.subr.mxu0 0.0
    %195 = vmatpush1.msra.mxu0 0.0
    %196 = vmatprep.subr.mxu0 0.0
    %197 = vmatpush1.msra.mxu0 0.0
    %198 = vmatprep.subr.mxu0 0.0
    %199 = vmatpush1.msra.mxu0 0.0
    %200 = vmatprep.subr.mxu0 0.0
    %201 = vmatpush1.msra.mxu0 0.0
    %202 = vmatprep.subr.mxu0 0.0
    %203 = vmatpush1.msra.mxu0 0.0
    %204 = vmatprep.subr.mxu0 0.0
    %205 = vmatpush1.msra.mxu0 0.0
    %206 = vmatprep.subr.mxu0 0.0
    %207 = vmatpush1.msra.mxu0 0.0
    %208 = vmatprep.mubr.f32.mxu0 0.0
    %209 = vmatmul.mubr.f32.gmra.mrb[0].mxu0 %v142
    %v210 = vpop.f32.mrb[0].mxu0
    %v211 = vadd.f32 %v137, %v210
    %v212 = vpop.f32.mrb[0].mxu0
    %213 = vdwg.mxu0
    %v214 = vld [vmem:[#allocation6 + $0x30] sm:$0x1]
    %v215 = vlaneseq
    %v216 = vshrl.u32 %v215, 7
    %v217 = vsub.s32 0, %v216
    %v218 = vrot.slane %v214, %v217
    %v219 = vadd.f32 %v211, %v218
    %v220 = vxor.u32 %v219, 2147483648
    %v221 = vmul.f32 %v220, 1.442695
    %v222 = vpow.pop %v221
    %v223 = vadd.f32 %v222, 1.0
    %v224 = vrcp.pop %v223
    %v225 = vmul.f32 1.0, %v224
    %v226 = vtanh.pop %v219
    %v227 = vmul.f32 %v225, %v58
    %229 = vrot.lane.b32.xlu0 %v226, 32
    %v230 = vpop.permute.xlu0 %229
    %v232 = vmul.f32 %v225, %v230
    %234 = vrot.lane.b32.xlu0 %v232, 32
    %v235 = vpop.permute.xlu0 %234
    %v237 = vadd.f32 %v227, %v235
    %v238 = vtanh.pop %v237
    %240 = vrot.lane.b32.xlu0 %v238, 32
    %v241 = vpop.permute.xlu0 %240
    %v243 = vmul.f32 %v225, %v241
    %v244 = vld [vmem:[#allocation6 + $0x38] sm:$0xff]
    %v245 = vld [vmem:[#allocation6 + $0x40] sm:$0xff]
    %v246 = vld [vmem:[#allocation6 + $0x48] sm:$0xff]
    %v247 = vld [vmem:[#allocation6 + $0x50] sm:$0xff]
    %v248 = vld [vmem:[#allocation6 + $0x58] sm:$0xff]
    %v249 = vld [vmem:[#allocation6 + $0x60] sm:$0xff]
    %v250 = vld [vmem:[#allocation6 + $0x68] sm:$0xff]
    %v251 = vld [vmem:[#allocation6 + $0x70] sm:$0xff]
    %252 = vrot.lane.b32.xlu0 %v58, 64
    %v253 = vpop.permute.xlu0 %252
    %v254 = vsel %vm66, %v253, 0
    %256 = vmatprep.subr.mxu0 0.0
    %257 = vmatpush1.msra.mxu0 %v248
    %258 = vmatprep.subr.mxu0 0.0
    %259 = vmatpush1.msra.mxu0 %v249
    %260 = vmatprep.subr.mxu0 0.0
    %261 = vmatpush1.msra.mxu0 %v250
    %262 = vmatprep.subr.mxu0 0.0
    %263 = vmatpush1.msra.mxu0 %v251
    %264 = vmatprep.subr.mxu0 0.0
    %265 = vmatpush1.msra.mxu0 0.0
    %266 = vmatprep.subr.mxu0 0.0
    %267 = vmatpush1.msra.mxu0 0.0
    %268 = vmatprep.subr.mxu0 0.0
    %269 = vmatpush1.msra.mxu0 0.0
    %270 = vmatprep.subr.mxu0 0.0
    %271 = vmatpush1.msra.mxu0 0.0
    %272 = vmatprep.subr.mxu0 0.0
    %273 = vmatpush1.msra.mxu0 0.0
    %274 = vmatprep.subr.mxu0 0.0
    %275 = vmatpush1.msra.mxu0 0.0
    %276 = vmatprep.subr.mxu0 0.0
    %277 = vmatpush1.msra.mxu0 0.0
    %278 = vmatprep.subr.mxu0 0.0
    %279 = vmatpush1.msra.mxu0 0.0
    %280 = vmatprep.subr.mxu0 0.0
    %281 = vmatpush1.msra.mxu0 0.0
    %282 = vmatprep.subr.mxu0 0.0
    %283 = vmatpush1.msra.mxu0 0.0
    %284 = vmatprep.subr.mxu0 0.0
    %285 = vmatpush1.msra.mxu0 0.0
    %286 = vmatprep.subr.mxu0 0.0
    %287 = vmatpush1.msra.mxu0 0.0
    %288 = vmatprep.subr.mxu0 0.0
    %289 = vmatpush1.msra.mxu0 0.0
    %290 = vmatprep.subr.mxu0 0.0
    %291 = vmatpush1.msra.mxu0 0.0
    %292 = vmatprep.subr.mxu0 0.0
    %293 = vmatpush1.msra.mxu0 0.0
    %294 = vmatprep.subr.mxu0 0.0
    %295 = vmatpush1.msra.mxu0 0.0
    %296 = vmatprep.subr.mxu0 0.0
    %297 = vmatpush1.msra.mxu0 0.0
    %298 = vmatprep.subr.mxu0 0.0
    %299 = vmatpush1.msra.mxu0 0.0
    %300 = vmatprep.subr.mxu0 0.0
    %301 = vmatpush1.msra.mxu0 0.0
    %302 = vmatprep.subr.mxu0 0.0
    %303 = vmatpush1.msra.mxu0 0.0
    %304 = vmatprep.subr.mxu0 0.0
    %305 = vmatpush1.msra.mxu0 0.0
    %306 = vmatprep.subr.mxu0 0.0
    %307 = vmatpush1.msra.mxu0 0.0
    %308 = vmatprep.subr.mxu0 0.0
    %309 = vmatpush1.msra.mxu0 0.0
    %310 = vmatprep.subr.mxu0 0.0
    %311 = vmatpush1.msra.mxu0 0.0
    %312 = vmatprep.subr.mxu0 0.0
    %313 = vmatpush1.msra.mxu0 0.0
    %314 = vmatprep.subr.mxu0 0.0
    %315 = vmatpush1.msra.mxu0 0.0
    %316 = vmatprep.subr.mxu0 0.0
    %317 = vmatpush1.msra.mxu0 0.0
    %318 = vmatprep.subr.mxu0 0.0
    %319 = vmatpush1.msra.mxu0 0.0
    %320 = vmatprep.mubr.f32.mxu0 0.0
    %321 = vmatmul.mubr.f32.gmra.mrb[0].mxu0 %v254
    %v322 = vpop.f32.mrb[0].mxu0
    %v323 = vadd.f32 0.0, %v322
    %v324 = vpop.f32.mrb[0].mxu0
    %325 = vdwg.mxu0
    %327 = vrot.lane.b32.xlu0 %v243, 64
    %v328 = vpop.permute.xlu0 %327
    %v329 = vsel %vm66, %v328, 0
    %331 = vmatprep.subr.mxu0 0.0
    %332 = vmatpush1.msra.mxu0 %v244
    %333 = vmatprep.subr.mxu0 0.0
    %334 = vmatpush1.msra.mxu0 %v245
    %335 = vmatprep.subr.mxu0 0.0
    %336 = vmatpush1.msra.mxu0 %v246
    %337 = vmatprep.subr.mxu0 0.0
    %338 = vmatpush1.msra.mxu0 %v247
    %339 = vmatprep.subr.mxu0 0.0
    %340 = vmatpush1.msra.mxu0 0.0
    %341 = vmatprep.subr.mxu0 0.0
    %342 = vmatpush1.msra.mxu0 0.0
    %343 = vmatprep.subr.mxu0 0.0
    %344 = vmatpush1.msra.mxu0 0.0
    %345 = vmatprep.subr.mxu0 0.0
    %346 = vmatpush1.msra.mxu0 0.0
    %347 = vmatprep.subr.mxu0 0.0
    %348 = vmatpush1.msra.mxu0 0.0
    %349 = vmatprep.subr.mxu0 0.0
    %350 = vmatpush1.msra.mxu0 0.0
    %351 = vmatprep.subr.mxu0 0.0
    %352 = vmatpush1.msra.mxu0 0.0
    %353 = vmatprep.subr.mxu0 0.0
    %354 = vmatpush1.msra.mxu0 0.0
    %355 = vmatprep.subr.mxu0 0.0
    %356 = vmatpush1.msra.mxu0 0.0
    %357 = vmatprep.subr.mxu0 0.0
    %358 = vmatpush1.msra.mxu0 0.0
    %359 = vmatprep.subr.mxu0 0.0
    %360 = vmatpush1.msra.mxu0 0.0
    %361 = vmatprep.subr.mxu0 0.0
    %362 = vmatpush1.msra.mxu0 0.0
    %363 = vmatprep.subr.mxu0 0.0
    %364 = vmatpush1.msra.mxu0 0.0
    %365 = vmatprep.subr.mxu0 0.0
    %366 = vmatpush1.msra.mxu0 0.0
    %367 = vmatprep.subr.mxu0 0.0
    %368 = vmatpush1.msra.mxu0 0.0
    %369 = vmatprep.subr.mxu0 0.0
    %370 = vmatpush1.msra.mxu0 0.0
    %371 = vmatprep.subr.mxu0 0.0
    %372 = vmatpush1.msra.mxu0 0.0
    %373 = vmatprep.subr.mxu0 0.0
    %374 = vmatpush1.msra.mxu0 0.0
    %375 = vmatprep.subr.mxu0 0.0
    %376 = vmatpush1.msra.mxu0 0.0
    %377 = vmatprep.subr.mxu0 0.0
    %378 = vmatpush1.msra.mxu0 0.0
    %379 = vmatprep.subr.mxu0 0.0
    %380 = vmatpush1.msra.mxu0 0.0
    %381 = vmatprep.subr.mxu0 0.0
    %382 = vmatpush1.msra.mxu0 0.0
    %383 = vmatprep.subr.mxu0 0.0
    %384 = vmatpush1.msra.mxu0 0.0
    %385 = vmatprep.subr.mxu0 0.0
    %386 = vmatpush1.msra.mxu0 0.0
    %387 = vmatprep.subr.mxu0 0.0
    %388 = vmatpush1.msra.mxu0 0.0
    %389 = vmatprep.subr.mxu0 0.0
    %390 = vmatpush1.msra.mxu0 0.0
    %391 = vmatprep.subr.mxu0 0.0
    %392 = vmatpush1.msra.mxu0 0.0
    %393 = vmatprep.subr.mxu0 0.0
    %394 = vmatpush1.msra.mxu0 0.0
    %395 = vmatprep.mubr.f32.mxu0 0.0
    %396 = vmatmul.mubr.f32.gmra.mrb[0].mxu0 %v329
    %v397 = vpop.f32.mrb[0].mxu0
    %v398 = vadd.f32 %v323, %v397
    %v399 = vpop.f32.mrb[0].mxu0
    %400 = vdwg.mxu0
    %v401 = vld [vmem:[#allocation6 + $0x78] sm:$0x1]
    %v402 = vlaneseq
    %v403 = vshrl.u32 %v402, 7
    %v404 = vsub.s32 0, %v403
    %v405 = vrot.slane %v401, %v404
    %v406 = vadd.f32 %v398, %v405
    %v407 = vxor.u32 %v406, 2147483648
    %v408 = vmul.f32 %v407, 1.442695
    %v409 = vpow.pop %v408
    %v410 = vadd.f32 %v409, 1.0
    %v411 = vrcp.pop %v410
    %v412 = vmul.f32 1.0, %v411
    %v413 = vtanh.pop %v406
    %v415 = vmul.f32 %v412, %v253
    %417 = vrot.lane.b32.xlu0 %v413, 32
    %v418 = vpop.permute.xlu0 %417
    %v420 = vmul.f32 %v412, %v418
    %422 = vrot.lane.b32.xlu0 %v420, 32
    %v423 = vpop.permute.xlu0 %422
    %v425 = vadd.f32 %v415, %v423
    %v426 = vtanh.pop %v425
    %428 = vrot.lane.b32.xlu0 %v426, 32
    %v429 = vpop.permute.xlu0 %428
    %v431 = vmul.f32 %v412, %v429
    %433 = vst.msk [vmem:[#allocation2] sm:$0xff] %vm66, %v328
    %vm434 = vcmask 523520
    %435 = vst.msk [vmem:[#allocation2] sm:$0xff] %vm434, %v237
    %vm436 = vcmask 785920
    %437 = vst.msk [vmem:[#allocation2] sm:$0xff] %vm436, %v431
    %439 = vrot.lane.b32.xlu0 %v425, 64
    %v440 = vpop.permute.xlu0 %439
    %vm442 = vcmask 1048320
    %443 = vst.msk [vmem:[#allocation2] sm:$0xff] %vm442, %v440
    %v444 = vld [vmem:[#allocation2] sm:$0xff]
    %445 = vst [vmem:[#allocation9] sm:$0xff] %v444
    // Predicated region
    $region30: #{tpu_custom_call.1} parent=1 // pred_check
      _
    $region31: #{tpu_custom_call.1} parent=1 // pred_check_branch
      %447 = sbr.rel (0) target = $region33
    $region32: #{tpu_custom_call.1} parent=1 // pred_region
      %s449 = ssub.s32 128, 128
      %450 = vsyncadd [#allocation5], %s449
      %s452 = sshll.u32 [#allocation9], 4
      %s453 = int_to_ptr.vmem [resolvable:$true] %s452
      %455 = dma.vmem_to_hbm [thread:$0]  %s453, 128, %s3, [#allocation5]
    $region33: #{tpu_custom_call.1} parent=1 // pred_fallthru
      _
    // Predicated region
    $region34: #{tpu_custom_call.1} parent=1 // pred_check
      _
    $region35: #{tpu_custom_call.1} parent=1 // pred_check_branch
      %457 = sbr.rel (0) target = $region37
    $region36: #{tpu_custom_call.1} parent=1 // pred_region
      %458 = dma.done [#allocation5], 128
    $region37: #{tpu_custom_call.1} parent=1 // pred_fallthru
      _
    %459 = vsyncpa [#allocation4], 1
    %460 = vsyncpa [#allocation7], 1
    %461 = vsyncpa [#allocation5], 1

</llo_original>
